<compile_context>
chip_gen: v7x
topology: tpu7x:2x2x1
jax: 0.10.0
libtpu: 0.0.40
codegen_flags: <defaults>
</compile_context>

<pallas_src>
import functools
import math

import jax
import jax.numpy as jnp
from jax.experimental import pallas as pl
from jax.experimental.pallas import tpu as pltpu

GELU_GAMMA = 1.7015043497085571  # timm's variance-preserving gamma for gelu in NF nets


# ----------------------------------------------------------------------------
# In-kernel activation helper (traced inside Pallas kernels, f32 math).
# ----------------------------------------------------------------------------
def _apply_act(x, act):
    if act == "none":
        return x
    if act == "gelu":
        # TODO(synk): PyTorch nn.GELU is the exact erf form; tanh approximation used here.
        return jax.nn.gelu(x, approximate=True) * GELU_GAMMA
    if act == "relu":
        return jnp.maximum(x, 0.0)
    if act == "sigmoid":
        return jax.nn.sigmoid(x)
    if act == "mish":
        return x * jnp.tanh(jnp.logaddexp(x, 0.0))
    raise ValueError(act)


def _round_up(n, m):
    return ((n + m - 1) // m) * m


# ----------------------------------------------------------------------------
# Pallas kernels
# ----------------------------------------------------------------------------
def _matmul_kernel(a_ref, b_ref, bias_ref, o_ref, acc_ref, *, act):
    """bf16 MXU matmul, f32 accumulation; bias+activation only on the last K step."""
    k = pl.program_id(1)

    @pl.when(k == 0)
    def _():
        acc_ref[...] = jnp.zeros_like(acc_ref)

    acc_ref[...] += jnp.dot(a_ref[...], b_ref[...],
                            preferred_element_type=jnp.float32)

    @pl.when(k == pl.num_programs(1) - 1)
    def _():
        acc = acc_ref[...] + bias_ref[...]
        o_ref[...] = _apply_act(acc, act).astype(o_ref.dtype)


def _ws_kernel(w_ref, gain_ref, o_ref, *, scale, eps):
    # ScaledStdConv2d weight standardization, per output channel over fan_in (axis 0).
    w = w_ref[...]
    mean = jnp.mean(w, axis=0, keepdims=True)
    var = jnp.mean((w - mean) ** 2, axis=0, keepdims=True)
    o_ref[...] = ((w - mean) * jax.lax.rsqrt(var + eps)
                  * (gain_ref[...] * scale)).astype(o_ref.dtype)


def _scale_act_kernel(x_ref, o_ref, *, scale, act):
    x = x_ref[...].astype(jnp.float32) * scale
    o_ref[...] = _apply_act(x, act).astype(o_ref.dtype)


def _pool_mlp_kernel(x_ref, w1_ref, b1_ref, w2_ref, b2_ref, o_ref, *, act1, act2):
    # Fused: global-avg-pool over spatial dim -> fc1 -> act1 -> fc2 -> act2.
    pooled = jnp.mean(x_ref[...].astype(jnp.float32), axis=1)            # (N, C)
    h = jnp.dot(pooled, w1_ref[...], preferred_element_type=jnp.float32) + b1_ref[...]
    h = _apply_act(h, act1)
    o = jnp.dot(h, w2_ref[...], preferred_element_type=jnp.float32) + b2_ref[...]
    o_ref[...] = _apply_act(o, act2)


def _se_residual_kernel(x_ref, g_ref, sc_ref, o_ref, *, alpha):
    # Fused SE gating (attn_gain = 2.0) + alpha-scaled residual add.
    x = x_ref[...].astype(jnp.float32)
    sc = sc_ref[...].astype(jnp.float32)
    o_ref[...] = (x * g_ref[...] * (2.0 * alpha) + sc).astype(o_ref.dtype)


# ----------------------------------------------------------------------------
# Pallas wrappers
# ----------------------------------------------------------------------------
def matmul_bias_act(a, b, bias, act="none", out_dtype=jnp.bfloat16):
    """(M,K) @ (K,N) + bias with fused activation.

    M is tiled (parallel -> second TensorCore on v7x); K only becomes a grid loop
    for deep reductions.  Full-extent K/N blocks avoid all pad/slice copies for the
    small channel counts of this net.  TM=256 fits comfortably in v7x's 64 MiB VMEM
    (use 128 on v5e if sweeping).
    """
    M, K = a.shape
    K2, N = b.shape
    assert K == K2

    a = a.astype(jnp.bfloat16)
    b = b.astype(jnp.bfloat16)
    bias2 = bias.astype(jnp.float32).reshape(1, N)

    TM = 256
    if M <= TM:
        tm, Mp = M, M
    else:
        tm = TM
        Mp = _round_up(M, TM)
        a = jnp.pad(a, ((0, Mp - M), (0, 0)))

    TK = 512
    if K <= 2048:
        tk, Kp = K, K
    else:  # zero-padded K tiles contribute nothing to the accumulator
        tk = TK
        Kp = _round_up(K, TK)
        a = jnp.pad(a, ((0, 0), (0, Kp - K)))
        b = jnp.pad(b, ((0, Kp - K), (0, 0)))

    out = pl.pallas_call(
        functools.partial(_matmul_kernel, act=act),
        grid=(Mp // tm, Kp // tk),
        in_specs=[
            pl.BlockSpec((tm, tk), lambda i, k: (i, k)),
            pl.BlockSpec((tk, N), lambda i, k: (k, 0)),
            pl.BlockSpec((1, N), lambda i, k: (0, 0)),
        ],
        out_specs=pl.BlockSpec((tm, N), lambda i, k: (i, 0)),
        out_shape=jax.ShapeDtypeStruct((Mp, N), out_dtype),
        scratch_shapes=[pltpu.VMEM((tm, N), jnp.float32)],
        compiler_params=pltpu.CompilerParams(
            dimension_semantics=("parallel", "arbitrary")),
    )(a, b, bias2)
    return out[:M] if Mp != M else out


def standardize_weight(w, gain, eps=1e-6):
    """ScaledStdConv2d weight standardization -> bf16 (fan_in, O) matmul operand.

    The returned layout already matches the im2col patch order (kh, kw, Cin) so it
    feeds the matmul kernel with no extra transpose/cast pass.
    """
    O, Cin, kh, kw = w.shape
    fan_in = Cin * kh * kw
    w2d = jnp.transpose(w, (2, 3, 1, 0)).reshape(fan_in, O).astype(jnp.float32)
    g2d = gain.reshape(1, O).astype(jnp.float32)
    return pl.pallas_call(
        functools.partial(_ws_kernel, scale=float(fan_in) ** -0.5, eps=eps),
        grid=(1,),
        in_specs=[
            pl.BlockSpec((fan_in, O), lambda i: (0, 0)),
            pl.BlockSpec((1, O), lambda i: (0, 0)),
        ],
        out_specs=pl.BlockSpec((fan_in, O), lambda i: (0, 0)),
        out_shape=jax.ShapeDtypeStruct((fan_in, O), jnp.bfloat16),
    )(w2d, g2d)


def scale_act(x, scale, act):
    """Elementwise activation of (x * scale); row-tiled, lane-dense last dim."""
    shp = x.shape
    C = shp[-1]
    x2 = x.reshape(-1, C)
    R = x2.shape[0]
    TR = 1024
    if R <= TR:
        tr, Rp = R, R
    else:
        tr = TR
        Rp = _round_up(R, TR)
        x2 = jnp.pad(x2, ((0, Rp - R), (0, 0)))
    out = pl.pallas_call(
        functools.partial(_scale_act_kernel, scale=float(scale), act=act),
        grid=(Rp // tr,),
        in_specs=[pl.BlockSpec((tr, C), lambda i: (i, 0))],
        out_specs=pl.BlockSpec((tr, C), lambda i: (i, 0)),
        out_shape=jax.ShapeDtypeStruct((Rp, C), x.dtype),
        compiler_params=pltpu.CompilerParams(dimension_semantics=("parallel",)),
    )(x2)
    if Rp != R:
        out = out[:R]
    return out.reshape(shp)


def pool_mlp(x, p1, p2, act1, act2):
    """Fused global-avg-pool + 2-layer MLP (used for SE gates and the head)."""
    N, H, W, C = x.shape
    x3 = x.reshape(N, H * W, C)
    w1 = p1["w"].astype(jnp.float32)
    b1 = p1["b"].astype(jnp.float32).reshape(1, -1)
    w2 = p2["w"].astype(jnp.float32)
    b2 = p2["b"].astype(jnp.float32).reshape(1, -1)
    mid, cout = w1.shape[1], w2.shape[1]
    return pl.pallas_call(
        functools.partial(_pool_mlp_kernel, act1=act1, act2=act2),
        grid=(1,),
        in_specs=[
            pl.BlockSpec((N, H * W, C), lambda i: (0, 0, 0)),
            pl.BlockSpec((C, mid), lambda i: (0, 0)),
            pl.BlockSpec((1, mid), lambda i: (0, 0)),
            pl.BlockSpec((mid, cout), lambda i: (0, 0)),
            pl.BlockSpec((1, cout), lambda i: (0, 0)),
        ],
        out_specs=pl.BlockSpec((N, cout), lambda i: (0, 0)),
        out_shape=jax.ShapeDtypeStruct((N, cout), jnp.float32),
    )(x3, w1, b1, w2, b2)


def se_residual(x, gates, shortcut, alpha):
    """out = x * gate * 2 * alpha + shortcut, in one tiled elementwise kernel."""
    N, H, W, C = x.shape
    HW = H * W
    x3 = x.reshape(N, HW, C)
    sc3 = shortcut.reshape(N, HW, C)
    g3 = gates.reshape(N, 1, C)
    thw = 512 if (HW > 512 and HW % 512 == 0) else HW
    out = pl.pallas_call(
        functools.partial(_se_residual_kernel, alpha=float(alpha)),
        grid=(N, HW // thw),
        in_specs=[
            pl.BlockSpec((1, thw, C), lambda n, t: (n, t, 0)),
            pl.BlockSpec((1, 1, C), lambda n, t: (n, 0, 0)),
            pl.BlockSpec((1, thw, C), lambda n, t: (n, t, 0)),
        ],
        out_specs=pl.BlockSpec((1, thw, C), lambda n, t: (n, t, 0)),
        out_shape=jax.ShapeDtypeStruct((N, HW, C), x.dtype),
        compiler_params=pltpu.CompilerParams(
            dimension_semantics=("parallel", "parallel")),
    )(x3, g3, sc3)
    return out.reshape(N, H, W, C)


# ----------------------------------------------------------------------------
# NFNet building blocks (glue: im2col / residual / downsample pooling)
# ----------------------------------------------------------------------------
def conv2d_ws(x, w, gain, bias, stride=1, padding=0, act="none"):
    """ScaledStdConv2d (+ fused scaled activation). x: NHWC bf16, w: (O, Cin, kh, kw)."""
    O, Cin, kh, kw = w.shape
    b_mat = standardize_weight(w, gain)                       # (kh*kw*Cin, O) bf16
    N, H, W, C = x.shape
    assert C == Cin
    if padding:
        x = jnp.pad(x, ((0, 0), (padding, padding), (padding, padding), (0, 0)))
    Ho = (H + 2 * padding - kh) // stride + 1
    Wo = (W + 2 * padding - kw) // stride + 1
    # TODO(synk): im2col is still JAX-side; in-kernel conv-tap accumulation (extra
    # grid axis over kh*kw taps) would remove the 9x activation HBM inflation of 3x3 convs.
    if kh == 1 and kw == 1 and stride == 1:
        a = x.reshape(N * Ho * Wo, Cin)
    else:
        patches = [x[:, i:i + stride * Ho:stride, j:j + stride * Wo:stride, :]
                   for i in range(kh) for j in range(kw)]
        a = jnp.concatenate(patches, axis=-1).reshape(N * Ho * Wo, kh * kw * Cin)
    out = matmul_bias_act(a, b_mat, bias, act=act)
    return out.reshape(N, Ho, Wo, O)


def avg_pool_2x2(x):
    # TODO(synk): assumes even H/W (true for this net's stride pattern).
    N, H, W, C = x.shape
    return x.reshape(N, H // 2, 2, W // 2, 2, C).mean(axis=(2, 4)).astype(x.dtype)


def nf_block(x, p, alpha, beta, stride):
    """Normalizer-free residual block with SE attention (attn_gain = 2.0)."""
    out = scale_act(x, beta, "gelu")                          # pre-activation * beta
    if p["downsample"] is not None:
        sc = avg_pool_2x2(out) if stride > 1 else out
        shortcut = conv2d_ws(sc, stride=1, padding=0, act="none", **p["downsample"])
    else:
        shortcut = x
    out = conv2d_ws(out, stride=1, padding=0, act="gelu", **p["conv1"])
    out = conv2d_ws(out, stride=stride, padding=1, act="gelu", **p["conv2"])
    out = conv2d_ws(out, stride=1, padding=1, act="gelu", **p["conv2b"])
    out = conv2d_ws(out, stride=1, padding=0, act="none", **p["conv3"])
    # Squeeze-Excite (pool + 2-layer MLP fused), then fused gate * 2 * alpha + shortcut.
    gates = pool_mlp(out, p["se_fc1"], p["se_fc2"], act1="relu", act2="sigmoid")
    return se_residual(out, gates, shortcut, alpha)


def nfnet_forward(params, x_nchw):
    x = jnp.transpose(x_nchw, (0, 2, 3, 1)).astype(jnp.bfloat16)   # NCHW -> NHWC bf16
    # stem: WS-conv + scaled GELU fused into each matmul epilogue (no act after stem4)
    x = conv2d_ws(x, stride=2, padding=1, act="gelu", **params["stem1"])
    x = conv2d_ws(x, stride=1, padding=1, act="gelu", **params["stem2"])
    x = conv2d_ws(x, stride=1, padding=1, act="gelu", **params["stem3"])
    x = conv2d_ws(x, stride=2, padding=1, act="none", **params["stem4"])
    # stages
    alpha = 0.2
    x = nf_block(x, params["block1"], alpha=alpha, beta=1.0, stride=1)
    x = nf_block(x, params["block2"], alpha=alpha,
                 beta=1.0 / math.sqrt(1.0 + alpha ** 2), stride=2)
    # final_conv with final_act (scaled GELU) fused into its matmul epilogue
    x = conv2d_ws(x, stride=1, padding=0, act="gelu", **params["final_conv"])
    # head (self.out of the reference module is never used in forward)
    # TODO(synk): reference `Head` source not provided; approximated as
    # global-avg-pool -> Linear -> Mish -> Linear(num_class), fused in one kernel.
    return pool_mlp(x, params["head_fc1"], params["head_fc2"], act1="mish", act2="none")


# ----------------------------------------------------------------------------
# Deterministic parameter init (synthetic; no checkpoint loading)
# ----------------------------------------------------------------------------
def _conv_params(key, cout, cin, kh, kw):
    w = jax.random.normal(key, (cout, cin, kh, kw), jnp.float32) / math.sqrt(cin * kh * kw)
    return {"w": w,
            "gain": jnp.ones((cout,), jnp.float32),
            "bias": jnp.zeros((cout,), jnp.float32)}


def _linear_params(key, cin, cout):
    w = jax.random.normal(key, (cin, cout), jnp.float32) / math.sqrt(cin)
    return {"w": w, "b": jnp.zeros((cout,), jnp.float32)}


def init_params(key, num_class=2):
    keys = iter(jax.random.split(key, 32))
    p = {}
    # stem: 3 -> 8 -> 16 -> 16 -> 32
    p["stem1"] = _conv_params(next(keys), 8, 3, 3, 3)
    p["stem2"] = _conv_params(next(keys), 16, 8, 3, 3)
    p["stem3"] = _conv_params(next(keys), 16, 16, 3, 3)
    p["stem4"] = _conv_params(next(keys), 32, 16, 3, 3)

    def block_params(cin, cmid, cout, downsample):
        return {
            "conv1": _conv_params(next(keys), cmid, cin, 1, 1),
            "conv2": _conv_params(next(keys), cmid, cmid, 3, 3),
            "conv2b": _conv_params(next(keys), cmid, cmid, 3, 3),
            "conv3": _conv_params(next(keys), cout, cmid, 1, 1),
            "se_fc1": _linear_params(next(keys), cout, max(cout // 4, 4)),
            "se_fc2": _linear_params(next(keys), max(cout // 4, 4), cout),
            "downsample": _conv_params(next(keys), cout, cin, 1, 1) if downsample else None,
        }

    p["block1"] = block_params(32, 16, 32, downsample=False)
    p["block2"] = block_params(32, 32, 64, downsample=True)
    p["final_conv"] = _conv_params(next(keys), 128, 64, 1, 1)   # in_features = 128
    p["head_fc1"] = _linear_params(next(keys), 128, 64)
    p["head_fc2"] = _linear_params(next(keys), 64, num_class)
    return p


if __name__ == "__main__":
    key = jax.random.PRNGKey(0)
    pkey, xkey = jax.random.split(key)
    params = init_params(pkey, num_class=2)
    # PyTorch-style NCHW input, in_chans=3
    x = jax.random.normal(xkey, (2, 3, 16, 16), jnp.float32)
    logits = nfnet_forward(params, x)
    jax.block_until_ready(logits)
    assert logits.shape == (2, 2), logits.shape
    print("KERNEL_OK")
</pallas_src>

<mosaic_0001>
module attributes {stable_mosaic.version = 11 : i64} {
  func.func @_ws_kernel(%arg0: i32, %arg1: memref<27x8xf32, #tpu.memory_space<vmem>>, %arg2: memref<1x8xf32, #tpu.memory_space<vmem>>, %arg3: memref<27x8xbf16, #tpu.memory_space<vmem>>) attributes {dimension_semantics = [#tpu.dimension_semantics<arbitrary>], iteration_bounds = array<i64: 1>, scalar_prefetch = 0 : i64, scratch_operands = 0 : i64, tpu.core_type = #tpu.core_type<tc>, window_params = [{pipeline_mode = #tpu.pipeline_mode<synchronous>, transform_indices = @transform_0, window_bounds = array<i64: 27, 8>}, {pipeline_mode = #tpu.pipeline_mode<synchronous>, transform_indices = @transform_1, window_bounds = array<i64: 1, 8>}, {pipeline_mode = #tpu.pipeline_mode<synchronous>, transform_indices = @transform_2, window_bounds = array<i64: 27, 8>}]} {
    %c0 = arith.constant 0 : index
    %c0_0 = arith.constant 0 : index
    %0 = vector.load %arg1[%c0, %c0_0] : memref<27x8xf32, #tpu.memory_space<vmem>>, vector<27x8xf32>
    %cst = arith.constant dense<0.000000e+00> : vector<8xf32>
    %1 = vector.multi_reduction <add>, %0, %cst [0] : vector<27x8xf32> to vector<8xf32>
    %2 = vector.shape_cast %1 : vector<8xf32> to vector<1x8xf32>
    %cst_1 = arith.constant 2.700000e+01 : f32
    %3 = vector.broadcast %cst_1 : f32 to vector<1x8xf32>
    %4 = arith.divf %2, %3 : vector<1x8xf32>
    %5 = vector.broadcast %4 : vector<1x8xf32> to vector<27x8xf32>
    %6 = arith.subf %0, %5 : vector<27x8xf32>
    %7 = arith.mulf %6, %6 : vector<27x8xf32>
    %cst_2 = arith.constant dense<0.000000e+00> : vector<8xf32>
    %8 = vector.multi_reduction <add>, %7, %cst_2 [0] : vector<27x8xf32> to vector<8xf32>
    %9 = vector.shape_cast %8 : vector<8xf32> to vector<1x8xf32>
    %cst_3 = arith.constant 2.700000e+01 : f32
    %10 = vector.broadcast %cst_3 : f32 to vector<1x8xf32>
    %11 = arith.divf %9, %10 : vector<1x8xf32>
    %12 = vector.broadcast %4 : vector<1x8xf32> to vector<27x8xf32>
    %13 = arith.subf %0, %12 : vector<27x8xf32>
    %cst_4 = arith.constant 9.99999997E-7 : f32
    %14 = vector.broadcast %cst_4 : f32 to vector<1x8xf32>
    %15 = arith.addf %11, %14 : vector<1x8xf32>
    %16 = math.rsqrt %15 : vector<1x8xf32>
    %17 = vector.broadcast %16 : vector<1x8xf32> to vector<27x8xf32>
    %18 = arith.mulf %13, %17 : vector<27x8xf32>
    %c0_5 = arith.constant 0 : index
    %c0_6 = arith.constant 0 : index
    %19 = vector.load %arg2[%c0_5, %c0_6] : memref<1x8xf32, #tpu.memory_space<vmem>>, vector<1x8xf32>
    %cst_7 = arith.constant 0.192450091 : f32
    %20 = vector.broadcast %cst_7 : f32 to vector<1x8xf32>
    %21 = arith.mulf %19, %20 : vector<1x8xf32>
    %22 = vector.broadcast %21 : vector<1x8xf32> to vector<27x8xf32>
    %23 = arith.mulf %18, %22 : vector<27x8xf32>
    %24 = arith.truncf %23 : vector<27x8xf32> to vector<27x8xbf16>
    %c0_8 = arith.constant 0 : index
    %c0_9 = arith.constant 0 : index
    %25 = vector.load %arg3[%c0_8, %c0_9] : memref<27x8xbf16, #tpu.memory_space<vmem>>, vector<27x8xbf16>
    tpu.vector_store %arg3[%c0_8, %c0_9], %24 {strides = array<i32>} : memref<27x8xbf16, #tpu.memory_space<vmem>>, vector<27x8xbf16>,
    return
  }
  func.func @transform_0(%arg0: i32) -> (i32, i32) {
    %c0_i32 = arith.constant 0 : i32
    %c0_i32_0 = arith.constant 0 : i32
    %c0_i32_1 = arith.constant 0 : i32
    return %c0_i32, %c0_i32_0 : i32, i32
  }
  func.func @transform_1(%arg0: i32) -> (i32, i32) {
    %c0_i32 = arith.constant 0 : i32
    %c0_i32_0 = arith.constant 0 : i32
    %c0_i32_1 = arith.constant 0 : i32
    return %c0_i32, %c0_i32_0 : i32, i32
  }
  func.func @transform_2(%arg0: i32) -> (i32, i32) {
    %c0_i32 = arith.constant 0 : i32
    %c0_i32_0 = arith.constant 0 : i32
    %c0_i32_1 = arith.constant 0 : i32
    return %c0_i32, %c0_i32_0 : i32, i32
  }
}

</mosaic_0001>

<llo_original>
// kernel: tpu_custom_call.1
$region0: #{tpu_custom_call.1}
  #allocation0 [shape = 'u32[]', space=smem, size = 0x4, offset = 0x4, fixed_abs, tag = 'smem constant byte address 0x4 - core index']
  #allocation1 [shape = 'u32[144,128]{1,0:T(1,128)}', space=vmem, size = 0x12000, scoped, tag = 'internal scratch']
  %s0 = inlined_call_operand.vmem [shape: f32[27,8], index: 0, kind: input, shape index: {}]
  %s1 = inlined_call_operand.vmem [shape: f32[1,8], index: 1, kind: input, shape index: {}]
  %s2 = inlined_call_operand.vmem [shape: bf16[27,8], index: 2, kind: output, shape index: {}]
  %s3 = sld [smem:[#allocation0]]
  $region18: #{tpu_custom_call.1} parent=0
    _
  %s5 = ssub.s32 1, %s3
  %s6 = scalar_select 0, %s5, %s3
  // Predicated region
  $region2: #{tpu_custom_call.1} parent=0 // pred_check
    _
  $region3: #{tpu_custom_call.1} parent=0 // pred_check_branch
    %8 = sbr.rel (0) target = $region5
  $region4: #{tpu_custom_call.1} parent=0 // pred_region
    _
  $region5: #{tpu_custom_call.1} parent=0 // pred_fallthru
    _
  // Predicated region
  $region6: #{tpu_custom_call.1} parent=0 // pred_check
    _
  $region7: #{tpu_custom_call.1} parent=0 // pred_check_branch
    %10 = sbr.rel (0) target = $region9
  $region8: #{tpu_custom_call.1} parent=0 // pred_region
    _
  $region9: #{tpu_custom_call.1} parent=0 // pred_fallthru
    _
  %v11 = vld [vmem:[%s0] sm:$0xff]
  %v12 = vld [vmem:[%s0 + $0x8] sm:$0xff]
  %v13 = vld [vmem:[%s0 + $0x10] sm:$0xff]
  %v14 = vld [vmem:[%s0 + $0x18] sm:$0x7]
  %vm15 = vcmask 64512
  %v16 = vsel %vm15, %v11, 0.0
  %v17 = vsel %vm15, %v12, 0.0
  %v18 = vadd.f32 %v16, %v17
  %v19 = vsel %vm15, %v13, 0.0
  %v20 = vadd.f32 %v18, %v19
  %vm21 = vcmask 59392
  %v22 = vsel %vm21, %v14, 0.0
  %v23 = vadd.f32 %v20, %v22
  %v24 = vrot.slane %v23, 4
  %v25 = vadd.f32 %v23, %v24
  %v26 = vrot.slane %v25, 2
  %v27 = vadd.f32 %v25, %v26
  %v28 = vrot.slane %v27, 1
  %v29 = vadd.f32 %v27, %v28
  %v30 = vrcp.pop 27.0
  %v31 = vmul.f32 %v29, %v30
  %v32 = vsub.f32 %v11, %v31
  %v33 = vsub.f32 %v12, %v31
  %v34 = vsub.f32 %v13, %v31
  %v35 = vsub.f32 %v14, %v31
  %v36 = vmul.f32 %v32, %v32
  %v37 = vmul.f32 %v33, %v33
  %v38 = vmul.f32 %v34, %v34
  %v39 = vmul.f32 %v35, %v35
  %v40 = vsel %vm15, %v36, 0.0
  %v41 = vsel %vm15, %v37, 0.0
  %v42 = vadd.f32 %v40, %v41
  %v43 = vsel %vm15, %v38, 0.0
  %v44 = vadd.f32 %v42, %v43
  %v45 = vsel %vm21, %v39, 0.0
  %v46 = vadd.f32 %v44, %v45
  %v47 = vrot.slane %v46, 4
  %v48 = vadd.f32 %v46, %v47
  %v49 = vrot.slane %v48, 2
  %v50 = vadd.f32 %v48, %v49
  %v51 = vrot.slane %v50, 1
  %v52 = vadd.f32 %v50, %v51
  %v53 = vmul.f32 %v52, %v30
  %v54 = vadd.f32 %v53, 1e-06
  %v55 = vrsqrt.pop %v54
  %v56 = vmul.f32 %v32, %v55
  %v57 = vmul.f32 %v33, %v55
  %v58 = vmul.f32 %v34, %v55
  %v59 = vmul.f32 %v35, %v55
  %v60 = vld [vmem:[%s1] sm:$0x1]
  %v61 = vmul.f32 %v60, 0.19245009
  %v63 = vlaneseq
  %v64 = vshrl.u32 %v63, 7
  %v65 = vsub.s32 0, %v64
  %v66 = vrot.slane %v61, %v65
  %v68 = vmul.f32 %v56, %v66
  %v69 = vmul.f32 %v57, %v66
  %v70 = vmul.f32 %v58, %v66
  %v71 = vmul.f32 %v59, %v66
  %v72 = vpack.c.bf16 %v69, %v68
  %v73 = vpack.c.bf16 %v71, %v70
  %v76 = vunpack.c.l.b16 %v72
  %v77 = vunpack.c.h.b16 %v72
  %v78 = vunpack.c.l.b16 %v73
  %v79 = vunpack.c.h.b16 %v73
  %v80 = vpack.c.b16 %v76, %v76
  %v81 = vpack.c.b16 %v77, %v77
  %v82 = vpack.c.b16 %v78, %v78
  %v83 = vpack.c.b16 %v79, %v79
  %vm88 = vcmask 60416
  %89 = vst.msk [vmem:[%s2] sm:$0xf] %vm88, %v80
  %90 = vst.msk [vmem:[%s2 + $0x4] sm:$0xf] %vm88, %v81
  %91 = vst.msk [vmem:[%s2 + $0x8] sm:$0xf] %vm88, %v82
  %vm92 = vcmask 58368
  %vm93 = vsmask.f32 1280
  %vm94 = vmand %vm92, %vm93
  %v95 = vld [vmem:[%s2 + $0xc] sm:$0x3]
  %v96 = vsel %vm94, %v83, %v95
  %97 = vst [vmem:[%s2 + $0xc] sm:$0x3] %v96
  // Predicated region
  $region10: #{tpu_custom_call.1} parent=0 // pred_check
    _
  $region11: #{tpu_custom_call.1} parent=0 // pred_check_branch
    %99 = sbr.rel (0) target = $region13
  $region12: #{tpu_custom_call.1} parent=0 // pred_region
    _
  $region13: #{tpu_custom_call.1} parent=0 // pred_fallthru
    _
  // Predicated region
  $region14: #{tpu_custom_call.1} parent=0 // pred_check
    _
  $region15: #{tpu_custom_call.1} parent=0 // pred_check_branch
    %101 = sbr.rel (0) target = $region17
  $region16: #{tpu_custom_call.1} parent=0 // pred_region
    _
  $region17: #{tpu_custom_call.1} parent=0 // pred_fallthru
    _

</llo_original>
